<compile_context>
chip_gen: v6e
topology: v6e:2x2x1
jax: 0.10.0
libtpu: 0.0.40
codegen_flags: <defaults>
</compile_context>

<pallas_src>
import functools
import math

import jax
import jax.numpy as jnp
from jax.experimental import pallas as pl
from jax.experimental.pallas import tpu as pltpu


# ----------------------------------------------------------------------------- helpers
def _round_up(a, m):
    return -(-a // m) * m


def _cdiv(a, b):
    return -(-a // b)


def _vmem_capacity_bytes():
    try:
        info = pltpu.get_tpu_info()
        for name in ("vmem_capacity_bytes", "vmem_bytes", "vmem_size_bytes"):
            v = getattr(info, name, None)
            if v:
                return int(v)
    except Exception:
        pass
    return 64 * 1024 * 1024        # conservative fallback (v7x per-TC)


def _label_dtype(tile_hw, c, ignore_index):
    """Narrowest label dtype compatible with the sublane tiling of the label block."""
    if tile_hw % 4096 == 0 and c <= 127 and -128 <= ignore_index <= 127:
        return jnp.int8            # (S,128) int8 tile needs S % 32 == 0
    if tile_hw % 2048 == 0 and c <= 32767 and -32768 <= ignore_index <= 32767:
        return jnp.int16           # needs S % 16 == 0
    return jnp.int32


def _focal_weight(ce, log_pt, gamma):
    """(1 - pt)**gamma * ce, with gamma==0 / small-integer fast paths (VPU only)."""
    g = float(gamma)
    if g == 0.0:
        return ce
    pt = jnp.exp(log_pt)
    one_m_pt = 1.0 - pt
    if g.is_integer() and 0.0 < g <= 16.0:
        n = int(g)
        focal, base = None, one_m_pt       # square-and-multiply: ~log2(g) muls
        while n:
            if n & 1:
                focal = base if focal is None else focal * base
            n >>= 1
            if n:
                base = base * base
    else:
        focal = jnp.power(one_m_pt, jnp.float32(g))
    return focal * ce


# ----------------------------------------------------------------------------- kernels
def _focal_kernel_seg(x_ref, y_ref, alpha_ref, loss_ref, cnt_ref, *,
                      gamma, ignore_index, use_alpha):
    """One (C, S, 128) logits block; accumulates (8, 128) loss / count partials."""
    j = pl.program_id(2)

    @pl.when(j == 0)
    def _():
        loss_ref[...] = jnp.zeros_like(loss_ref)
        cnt_ref[...] = jnp.zeros_like(cnt_ref)

    y = y_ref[0, 0].astype(jnp.int32)             # (S, 128) pixel labels
    valid = y != ignore_index                     # (S, 128)

    x = x_ref[0].astype(jnp.float32)              # (C, S, 128) classes across vregs
    c, s, l = x.shape
    # Sanitize ragged / padded pixels BEFORE the softmax so no NaN/Inf can appear.
    x = jnp.where(valid[None], x, 0.0)

    # log-softmax over the class axis (axis 0): cross-vreg VPU ops only.
    m = jnp.max(x, axis=0)                        # (S, 128)
    z = x - m[None]
    lse = jnp.log(jnp.sum(jnp.exp(z), axis=0))    # (S, 128)

    onehot = jax.lax.broadcasted_iota(jnp.int32, (c, s, l), 0) == y[None]
    z_y = jnp.sum(jnp.where(onehot, z, 0.0), axis=0)        # z[y]
    log_pt = z_y - lse

    if use_alpha:
        alpha = alpha_ref[...].astype(jnp.float32)          # (C, 1)
        a_y = jnp.sum(jnp.where(onehot, alpha[:, :, None], 0.0), axis=0)
        ce = -a_y * log_pt
    else:
        ce = -log_pt

    weighted = _focal_weight(ce, log_pt, gamma)
    vw = jnp.where(valid, weighted, 0.0)          # (S, 128)
    vc = valid.astype(jnp.float32)

    # (S, 128) -> (8, 128) partials: native-tile reshape + cross-vreg VPU adds.
    loss_ref[...] += jnp.sum(vw.reshape(s // 8, 8, l), axis=0)[None, None]
    cnt_ref[...] += jnp.sum(vc.reshape(s // 8, 8, l), axis=0)[None, None]


def _focal_kernel_cls(x_ref, y_ref, alpha_ref, loss_ref, cnt_ref, *,
                      gamma, ignore_index, use_alpha):
    """(N, C) path: one (TN, C) block, classes on lanes, per-class (8, C) partials."""
    j = pl.program_id(1)

    @pl.when(j == 0)
    def _():
        loss_ref[...] = jnp.zeros_like(loss_ref)
        cnt_ref[...] = jnp.zeros_like(cnt_ref)

    y = y_ref[...].astype(jnp.int32)              # (TN, 1)
    valid = y != ignore_index
    x = x_ref[...].astype(jnp.float32)            # (TN, C)
    tn, c = x.shape
    x = jnp.where(valid, x, 0.0)                  # sanitize ragged rows

    m = jnp.max(x, axis=-1, keepdims=True)
    z = x - m
    lse = jnp.log(jnp.sum(jnp.exp(z), axis=-1, keepdims=True))

    onehot = jax.lax.broadcasted_iota(jnp.int32, (tn, c), 1) == y
    z_y = jnp.sum(jnp.where(onehot, z, 0.0), axis=-1, keepdims=True)
    log_pt = z_y - lse

    if use_alpha:
        a_y = jnp.sum(jnp.where(onehot, alpha_ref[...].astype(jnp.float32), 0.0),
                      axis=-1, keepdims=True)
        ce = -a_y * log_pt
    else:
        ce = -log_pt

    weighted = _focal_weight(ce, log_pt, gamma)   # (TN, 1)
    w_full = jnp.where(onehot, weighted, 0.0)     # loss sits in its label's lane
    c_full = onehot.astype(jnp.float32)           # 1 at the label's lane for valid rows

    loss_ref[...] += jnp.sum(w_full.reshape(tn // 8, 8, c), axis=0)[None]
    cnt_ref[...] += jnp.sum(c_full.reshape(tn // 8, 8, c), axis=0)[None]


# ----------------------------------------------------------------------------- tiling
def _pick_tile_seg(hw128, c, itemsize, vmem_cap, x_gran):
    """Pixels per logits block for the (B, C, HW) path."""
    target = (8 << 20) if vmem_cap <= (80 << 20) else (16 << 20)   # v7x vs v5e/v6e
    budget = (vmem_cap * 3) // 4 - (4 << 20)
    per_pixel = 2 * c * itemsize + 2 * 4          # logits + worst-case int32 labels (x2 buffers)
    fit = max(x_gran, budget // per_pixel)
    tile = min(max(1, target // max(1, c * itemsize)), fit)
    # keep >= 2 pixel tiles per image when the image is big enough (v7x megacore split)
    half = _round_up(max(1, (hw128 + 1) // 2), x_gran)
    tile = min(tile, half)
    gran = max(x_gran, 4096) if tile >= 4096 else x_gran           # 4096-aligned => int8 labels
    tile = max(gran, (tile // gran) * gran)
    return int(tile)


def _pick_tile_cls(n, c, itemsize, vmem_cap, gran_n):
    """Samples per logits block for the (N, C) path."""
    target = (8 << 20) if vmem_cap <= (80 << 20) else (16 << 20)
    budget = (vmem_cap * 3) // 4 - (4 << 20)
    c_pad = _round_up(c, 128)
    per_row = 2 * c_pad * itemsize + 2 * 128 * 4  # lane-padded logits + (TN,1) int32 labels
    fit = max(gran_n, budget // per_row)
    tile = min(max(1, target // max(1, c_pad * itemsize)), fit, 8192)
    half = _round_up(max(1, (n + 1) // 2), gran_n)
    tile = min(tile, half)
    tile = max(gran_n, (tile // gran_n) * gran_n)
    return int(tile)


# ----------------------------------------------------------------------------- wrapper
def focal_loss(x, y, alpha=None, gamma=0.0, reduction="mean",
               ignore_index=-100, tile=None):
    """JAX/Pallas equivalent of FocalLoss.forward(x, y)."""
    if reduction not in ("mean", "sum", "none"):
        raise ValueError('Reduction must be one of: "mean", "sum", "none".')
    if reduction == "none":
        # TODO(synk): torch's reduction='none' returns a dynamically-shaped per-row loss
        # of only the non-ignored rows; there is no static-shape Pallas equivalent.
        raise NotImplementedError("reduction='none' is not supported by this kernel")

    vmem_cap = _vmem_capacity_bytes()
    use_alpha = alpha is not None
    gamma = float(gamma)
    ignore_index = int(ignore_index)

    if x.ndim > 2:
        # ---------------- (B, C, d1..dK) segmentation path ----------------
        b, c = int(x.shape[0]), int(x.shape[1])
        hw = int(math.prod(x.shape[2:]))
        itemsize = jnp.dtype(x.dtype).itemsize
        x_gran = 1024 * max(1, 4 // itemsize)     # S_block granule: 8 rows f32 / 16 rows bf16

        hw128 = _round_up(hw, 128)
        if tile is not None:
            tile_hw = max(x_gran, _round_up(int(tile), x_gran))
        else:
            tile_hw = _pick_tile_seg(hw128, c, itemsize, vmem_cap, x_gran)
        s_blk = tile_hw // 128

        hw_x = max(hw128, tile_hw)                # logits padded only if tiny / unaligned
        n_blk = _cdiv(hw_x, tile_hw)
        p_split = 2 if n_blk >= 2 else 1          # 2-way pixel split -> v7x megacore
        n_inner = _cdiv(n_blk, p_split)
        hw_total = p_split * n_inner * tile_hw    # label coverage (labels are cheap to pad)

        if 2 * c * tile_hw * itemsize > vmem_cap:
            # TODO(synk): very large C (LLM-vocab style) needs class-tiled online softmax;
            # this single-pass kernel keeps the full class axis of one pixel tile in VMEM.
            pass

        ldtype = _label_dtype(tile_hw, c, ignore_index)
        lbl_isz = jnp.dtype(ldtype).itemsize

        # Logits: free row-major view when HW is already lane-aligned and >= one tile.
        x3 = x.reshape(b, c, hw)
        if hw_x != hw:
            x3 = jnp.pad(x3, ((0, 0), (0, 0), (0, hw_x - hw)))
        x4 = x3.reshape(b, c, hw_x // 128, 128)

        # Labels: narrow dtype + pad with ignore_index so every grid block is covered.
        y2 = y.reshape(b, hw).astype(ldtype)
        if hw_total != hw:
            y2 = jnp.pad(y2, ((0, 0), (0, hw_total - hw)),
                         constant_values=ignore_index)
        y4 = y2.reshape(b, 1, hw_total // 128, 128)

        alpha_op = (jnp.asarray(alpha, jnp.float32).reshape(c, 1) if use_alpha
                    else jnp.ones((c, 1), jnp.float32))

        need_clamp = p_split * n_inner > n_blk    # odd block count -> one dummy block

        def x_map(bi, p, j):
            blk = p * n_inner + j
            if need_clamp:                        # dummy block re-reads the last real block
                blk = jnp.minimum(blk, n_blk - 1)
            return (bi, 0, blk, 0)

        def y_map(bi, p, j):
            return (bi, 0, p * n_inner + j, 0)

        live = (2 * c * tile_hw * itemsize            # logits, double buffered
                + 2 * s_blk * 128 * lbl_isz           # labels, double buffered
                + 2 * 2 * 8 * 128 * 4                 # two resident (8,128) f32 accumulators
                + 2 * _round_up(c, 8) * 128 * 4)      # alpha (C,1), lane-padded
        vmem_limit = int(min(vmem_cap, max(32 << 20, live + (4 << 20))))

        kern = functools.partial(_focal_kernel_seg, gamma=gamma,
                                 ignore_index=ignore_index, use_alpha=use_alpha)
        loss_p, cnt_p = pl.pallas_call(
            kern,
            out_shape=(jax.ShapeDtypeStruct((b, p_split, 8, 128), jnp.float32),
                       jax.ShapeDtypeStruct((b, p_split, 8, 128), jnp.float32)),
            grid_spec=pltpu.PrefetchScalarGridSpec(
                num_scalar_prefetch=0,
                grid=(b, p_split, n_inner),
                in_specs=[
                    pl.BlockSpec((1, c, s_blk, 128), x_map),        # logits
                    pl.BlockSpec((1, 1, s_blk, 128), y_map),        # labels
                    pl.BlockSpec((c, 1), lambda bi, p, j: (0, 0)),  # alpha
                ],
                out_specs=(
                    pl.BlockSpec((1, 1, 8, 128), lambda bi, p, j: (bi, p, 0, 0)),
                    pl.BlockSpec((1, 1, 8, 128), lambda bi, p, j: (bi, p, 0, 0)),
                )),
            compiler_params=pltpu.CompilerParams(
                dimension_semantics=("parallel", "parallel", "arbitrary"),
                vmem_limit_bytes=vmem_limit),
        )(x4, y4, alpha_op)
    else:
        # ---------------- (N, C) classification path (no host transpose) ----------------
        n, c = int(x.shape[0]), int(x.shape[1])
        itemsize = jnp.dtype(x.dtype).itemsize
        gran_n = 8 * max(1, 4 // itemsize)        # sublane granule for the sample axis
        if tile is not None:
            tile_n = max(gran_n, _round_up(int(tile), gran_n))
        else:
            tile_n = _pick_tile_cls(n, c, itemsize, vmem_cap, gran_n)

        n_blk = _cdiv(max(n, tile_n), tile_n)
        p_split = 2 if n_blk >= 2 else 1
        n_inner = _cdiv(n_blk, p_split)
        n_total = p_split * n_inner * tile_n

        x2d = x
        if n < tile_n:                            # tiny-N case: avoid a block > array
            x2d = jnp.pad(x2d, ((0, tile_n - n), (0, 0)))

        y1 = y.reshape(n).astype(jnp.int32)
        y1 = jnp.pad(y1, (0, n_total - n), constant_values=ignore_index)
        y2d = y1.reshape(n_total, 1)

        alpha_op = (jnp.asarray(alpha, jnp.float32).reshape(1, c) if use_alpha
                    else jnp.ones((1, c), jnp.float32))

        need_clamp = p_split * n_inner > n_blk

        def x_map(p, j):
            blk = p * n_inner + j
            if need_clamp:
                blk = jnp.minimum(blk, n_blk - 1)
            return (blk, 0)

        c_pad = _round_up(c, 128)
        live = (2 * tile_n * c_pad * itemsize          # logits (lane-padded), double buffered
                + 2 * tile_n * 128 * 4                 # (TN,1) int32 labels lane-pad to 128
                + 2 * 2 * 8 * c_pad * 4                # resident (8,C) accumulators
                + 2 * 8 * c_pad * 4)                   # alpha
        vmem_limit = int(min(vmem_cap, max(32 << 20, live + (4 << 20))))

        kern = functools.partial(_focal_kernel_cls, gamma=gamma,
                                 ignore_index=ignore_index, use_alpha=use_alpha)
        loss_p, cnt_p = pl.pallas_call(
            kern,
            out_shape=(jax.ShapeDtypeStruct((p_split, 8, c), jnp.float32),
                       jax.ShapeDtypeStruct((p_split, 8, c), jnp.float32)),
            grid_spec=pltpu.PrefetchScalarGridSpec(
                num_scalar_prefetch=0,
                grid=(p_split, n_inner),
                in_specs=[
                    pl.BlockSpec((tile_n, c), x_map),
                    pl.BlockSpec((tile_n, 1), lambda p, j: (p * n_inner + j, 0)),
                    pl.BlockSpec((1, c), lambda p, j: (0, 0)),
                ],
                out_specs=(
                    pl.BlockSpec((1, 8, c), lambda p, j: (p, 0, 0)),
                    pl.BlockSpec((1, 8, c), lambda p, j: (p, 0, 0)),
                )),
            compiler_params=pltpu.CompilerParams(
                dimension_semantics=("parallel", "arbitrary"),
                vmem_limit_bytes=vmem_limit),
        )(x2d, y2d, alpha_op)

    s = jnp.sum(loss_p)
    k = jnp.sum(cnt_p)
    if reduction == "sum":
        return s
    # torch returns tensor(0.0) when every label is ignored
    return jnp.where(k > 0, s / jnp.maximum(k, 1.0), jnp.float32(0.0))


# ----------------------------------------------------------------------------- reference
def _ref_focal(x, y, alpha, gamma, ignore_index, reduction="mean"):
    """Pure-JAX reference mirroring the PyTorch semantics."""
    c = x.shape[1] if x.ndim > 2 else x.shape[-1]
    xf = jnp.moveaxis(x, 1, -1).reshape(-1, c) if x.ndim > 2 else x
    yf = y.reshape(-1)
    valid = yf != ignore_index
    log_p = jax.nn.log_softmax(xf.astype(jnp.float32), axis=-1)
    ys = jnp.where(valid, yf, 0)
    log_pt = jnp.take_along_axis(log_p, ys[:, None], axis=-1)[:, 0]
    a = jnp.ones((c,), jnp.float32) if alpha is None else jnp.asarray(alpha, jnp.float32)
    ce = -a[ys] * log_pt
    pt = jnp.exp(log_pt)
    loss = jnp.where(valid, (1.0 - pt) ** gamma * ce, 0.0)
    if reduction == "sum":
        return jnp.sum(loss)
    return jnp.sum(loss) / jnp.sum(valid.astype(jnp.float32))


def _close(a, b, rtol=1e-4, atol=1e-3):
    return abs(float(a) - float(b)) <= atol + rtol * abs(float(b))


if __name__ == "__main__":
    key = jax.random.PRNGKey(0)
    kx, ky, km, ka, kx2, ky2, kx3, ky3, km3 = jax.random.split(key, 9)

    ignore_index = -100

    # ---- (B, C, H, W) segmentation path, small shape (per spec) ----
    B, C, H, W = 2, 4, 16, 16
    x = jax.random.normal(kx, (B, C, H, W), dtype=jnp.float32)
    y = jax.random.randint(ky, (B, H, W), 0, C, dtype=jnp.int32)
    y = jnp.where(jax.random.uniform(km, (B, H, W)) < 0.1, ignore_index, y)
    alpha = 0.25 + 0.75 * jax.random.uniform(ka, (C,), dtype=jnp.float32)

    out = focal_loss(x, y, alpha=alpha, gamma=2.0, reduction="mean",
                     ignore_index=ignore_index)
    out = jax.block_until_ready(out)
    ref = _ref_focal(x, y, alpha, 2.0, ignore_index, reduction="mean")
    assert _close(out, ref), (float(out), float(ref))

    out2 = focal_loss(x, y, alpha=None, gamma=0.0, reduction="sum",
                      ignore_index=ignore_index)
    out2 = jax.block_until_ready(out2)
    ref2 = _ref_focal(x, y, None, 0.0, ignore_index, reduction="sum")
    assert _close(out2, ref2), (float(out2), float(ref2))

    # ---- single-image case: exercises int8 labels, B==1 megacore pixel split,
    #      a ragged last block and the clamped dummy block ----
    B3, H3, W3 = 1, 96, 96
    x3 = jax.random.normal(kx3, (B3, C, H3, W3), dtype=jnp.float32)
    y3 = jax.random.randint(ky3, (B3, H3, W3), 0, C, dtype=jnp.int32)
    y3 = jnp.where(jax.random.uniform(km3, (B3, H3, W3)) < 0.1, ignore_index, y3)
    out3 = focal_loss(x3, y3, alpha=alpha, gamma=2.0, reduction="mean",
                      ignore_index=ignore_index)
    out3 = jax.block_until_ready(out3)
    ref3 = _ref_focal(x3, y3, alpha, 2.0, ignore_index, reduction="mean")
    assert _close(out3, ref3), (float(out3), float(ref3))

    # explicit small tile: exercises int16 labels and a different block count
    out3b = focal_loss(x3, y3, alpha=alpha, gamma=2.0, reduction="mean",
                       ignore_index=ignore_index, tile=2048)
    out3b = jax.block_until_ready(out3b)
    assert _close(out3b, ref3), (float(out3b), float(ref3))

    # ---- (N, C) classification path (no host transpose), non-integer gamma ----
    N2, C2 = 333, 5
    x2 = jax.random.normal(kx2, (N2, C2), dtype=jnp.float32)
    y2 = jax.random.randint(ky2, (N2,), 0, C2, dtype=jnp.int32)
    alpha2 = 0.5 + 0.5 * jax.random.uniform(ka, (C2,), dtype=jnp.float32)
    out4 = focal_loss(x2, y2, alpha=alpha2, gamma=1.5, reduction="mean",
                      ignore_index=ignore_index)
    out4 = jax.block_until_ready(out4)
    ref4 = _ref_focal(x2, y2, alpha2, 1.5, ignore_index, reduction="mean")
    assert _close(out4, ref4), (float(out4), float(ref4))

    print("KERNEL_OK")
</pallas_src>

<mosaic_0001>
module attributes {stable_mosaic.version = 11 : i64} {
  func.func @_focal_kernel_seg(%arg0: i32, %arg1: i32, %arg2: i32, %arg3: memref<1x4x8x128xf32, #tpu.memory_space<vmem>>, %arg4: memref<1x1x8x128xi32, #tpu.memory_space<vmem>>, %arg5: memref<4x1xf32, #tpu.memory_space<vmem>>, %arg6: memref<1x1x8x128xf32, #tpu.memory_space<vmem>>, %arg7: memref<1x1x8x128xf32, #tpu.memory_space<vmem>>) attributes {dimension_semantics = [#tpu.dimension_semantics<parallel>, #tpu.dimension_semantics<parallel>, #tpu.dimension_semantics<arbitrary>], iteration_bounds = array<i64: 2, 1, 1>, scalar_prefetch = 0 : i64, scratch_operands = 0 : i64, tpu.core_type = #tpu.core_type<tc>, window_params = [{transform_indices = @transform_0, window_bounds = array<i64: 1, 4, 8, 128>}, {transform_indices = @transform_1, window_bounds = array<i64: 1, 1, 8, 128>}, {pipeline_mode = #tpu.pipeline_mode<synchronous>, transform_indices = @transform_2, window_bounds = array<i64: 4, 1>}, {transform_indices = @transform_3, window_bounds = array<i64: 1, 1, 8, 128>}, {transform_indices = @transform_4, window_bounds = array<i64: 1, 1, 8, 128>}]} {
    %c0_i32 = arith.constant 0 : i32
    %0 = arith.cmpi eq, %arg2, %c0_i32 : i32
    %1 = arith.extui %0 : i1 to i32
    %c0_i32_0 = arith.constant 0 : i32
    %2 = arith.cmpi ne, %1, %c0_i32_0 : i32
    scf.if %2 {
      %cst_37 = arith.constant 0.000000e+00 : f32
      %60 = vector.broadcast %cst_37 : f32 to vector<1x1x8x128xf32>
      %c0_38 = arith.constant 0 : index
      %c0_39 = arith.constant 0 : index
      %c0_40 = arith.constant 0 : index
      %c0_41 = arith.constant 0 : index
      %61 = vector.load %arg6[%c0_38, %c0_39, %c0_40, %c0_41] : memref<1x1x8x128xf32, #tpu.memory_space<vmem>>, vector<1x1x8x128xf32>
      tpu.vector_store %arg6[%c0_38, %c0_39, %c0_40, %c0_41], %60 {strides = array<i32>} : memref<1x1x8x128xf32, #tpu.memory_space<vmem>>, vector<1x1x8x128xf32>,
      %cst_42 = arith.constant 0.000000e+00 : f32
      %62 = vector.broadcast %cst_42 : f32 to vector<1x1x8x128xf32>
      %c0_43 = arith.constant 0 : index
      %c0_44 = arith.constant 0 : index
      %c0_45 = arith.constant 0 : index
      %c0_46 = arith.constant 0 : index
      %63 = vector.load %arg7[%c0_43, %c0_44, %c0_45, %c0_46] : memref<1x1x8x128xf32, #tpu.memory_space<vmem>>, vector<1x1x8x128xf32>
      tpu.vector_store %arg7[%c0_43, %c0_44, %c0_45, %c0_46], %62 {strides = array<i32>} : memref<1x1x8x128xf32, #tpu.memory_space<vmem>>, vector<1x1x8x128xf32>,
    } else {
    }
    %c0 = arith.constant 0 : index
    %c0_1 = arith.constant 0 : index
    %c0_2 = arith.constant 0 : index
    %c0_3 = arith.constant 0 : index
    %3 = vector.load %arg4[%c0, %c0_1, %c0_2, %c0_3] : memref<1x1x8x128xi32, #tpu.memory_space<vmem>>, vector<1x1x8x128xi32>
    %4 = vector.shape_cast %3 : vector<1x1x8x128xi32> to vector<8x128xi32>
    %c-100_i32 = arith.constant -100 : i32
    %5 = vector.broadcast %c-100_i32 : i32 to vector<8x128xi32>
    %6 = arith.cmpi ne, %4, %5 : vector<8x128xi32>
    %c0_4 = arith.constant 0 : index
    %c0_5 = arith.constant 0 : index
    %c0_6 = arith.constant 0 : index
    %c0_7 = arith.constant 0 : index
    %7 = vector.load %arg3[%c0_4, %c0_5, %c0_6, %c0_7] : memref<1x4x8x128xf32, #tpu.memory_space<vmem>>, vector<1x4x8x128xf32>
    %8 = vector.shape_cast %7 : vector<1x4x8x128xf32> to vector<4x8x128xf32>
    %9 = vector.shape_cast %6 : vector<8x128xi1> to vector<1x8x128xi1>
    %cst = arith.constant 0.000000e+00 : f32
    %10 = vector.shape_cast %9 : vector<1x8x128xi1> to vector<1x8x128xi1>
    %11 = vector.broadcast %10 : vector<1x8x128xi1> to vector<4x8x128xi1>
    %12 = vector.broadcast %cst : f32 to vector<4x8x128xf32>
    %13 = arith.select %11, %8, %12 : vector<4x8x128xi1>, vector<4x8x128xf32>
    %cst_8 = arith.constant dense<0xFF800000> : vector<8x128xf32>
    %14 = vector.multi_reduction <maximumf>, %13, %cst_8 [0] : vector<4x8x128xf32> to vector<8x128xf32>
    %15 = vector.shape_cast %14 : vector<8x128xf32> to vector<1x8x128xf32>
    %16 = vector.broadcast %15 : vector<1x8x128xf32> to vector<4x8x128xf32>
    %17 = arith.subf %13, %16 : vector<4x8x128xf32>
    %18 = math.exp %17 : vector<4x8x128xf32>
    %cst_9 = arith.constant dense<0.000000e+00> : vector<8x128xf32>
    %19 = vector.multi_reduction <add>, %18, %cst_9 [0] : vector<4x8x128xf32> to vector<8x128xf32>
    %20 = math.log %19 : vector<8x128xf32>
    %21 = tpu.iota {dimensions = array<i32: 0>} : vector<4x8x128xi32>
    %22 = vector.shape_cast %4 : vector<8x128xi32> to vector<1x8x128xi32>
    %23 = vector.broadcast %22 : vector<1x8x128xi32> to vector<4x8x128xi32>
    %24 = arith.cmpi eq, %21, %23 : vector<4x8x128xi32>
    %cst_10 = arith.constant 0.000000e+00 : f32
    %25 = vector.broadcast %cst_10 : f32 to vector<4x8x128xf32>
    %26 = arith.select %24, %17, %25 : vector<4x8x128xi1>, vector<4x8x128xf32>
    %cst_11 = arith.constant dense<0.000000e+00> : vector<8x128xf32>
    %27 = vector.multi_reduction <add>, %26, %cst_11 [0] : vector<4x8x128xf32> to vector<8x128xf32>
    %28 = arith.subf %27, %20 : vector<8x128xf32>
    %c0_12 = arith.constant 0 : index
    %c0_13 = arith.constant 0 : index
    %29 = vector.load %arg5[%c0_12, %c0_13] : memref<4x1xf32, #tpu.memory_space<vmem>>, vector<4x1xf32>
    %30 = vector.shape_cast %29 : vector<4x1xf32> to vector<4x1x1xf32>
    %cst_14 = arith.constant 0.000000e+00 : f32
    %31 = vector.shape_cast %30 : vector<4x1x1xf32> to vector<4x1x1xf32>
    %32 = vector.broadcast %31 : vector<4x1x1xf32> to vector<4x8x128xf32>
    %33 = vector.broadcast %cst_14 : f32 to vector<4x8x128xf32>
    %34 = arith.select %24, %32, %33 : vector<4x8x128xi1>, vector<4x8x128xf32>
    %cst_15 = arith.constant dense<0.000000e+00> : vector<8x128xf32>
    %35 = vector.multi_reduction <add>, %34, %cst_15 [0] : vector<4x8x128xf32> to vector<8x128xf32>
    %cst_16 = arith.constant 0.000000e+00 : f32
    %36 = vector.broadcast %cst_16 : f32 to vector<8x128xf32>
    %37 = arith.subf %36, %35 : vector<8x128xf32>
    %38 = arith.mulf %37, %28 : vector<8x128xf32>
    %39 = math.exp %28 : vector<8x128xf32>
    %cst_17 = arith.constant 1.000000e+00 : f32
    %40 = vector.broadcast %cst_17 : f32 to vector<8x128xf32>
    %41 = arith.subf %40, %39 : vector<8x128xf32>
    %42 = arith.mulf %41, %41 : vector<8x128xf32>
    %43 = arith.mulf %42, %38 : vector<8x128xf32>
    %cst_18 = arith.constant 0.000000e+00 : f32
    %44 = vector.broadcast %cst_18 : f32 to vector<8x128xf32>
    %45 = arith.select %6, %43, %44 : vector<8x128xi1>, vector<8x128xf32>
    %46 = arith.extui %6 : vector<8x128xi1> to vector<8x128xi32>
    %47 = arith.sitofp %46 : vector<8x128xi32> to vector<8x128xf32>
    %c0_19 = arith.constant 0 : index
    %c0_20 = arith.constant 0 : index
    %c0_21 = arith.constant 0 : index
    %c0_22 = arith.constant 0 : index
    %48 = vector.load %arg6[%c0_19, %c0_20, %c0_21, %c0_22] : memref<1x1x8x128xf32, #tpu.memory_space<vmem>>, vector<1x1x8x128xf32>
    %49 = vector.shape_cast %45 : vector<8x128xf32> to vector<1x8x128xf32>
    %cst_23 = arith.constant dense<0.000000e+00> : vector<8x128xf32>
    %50 = vector.multi_reduction <add>, %49, %cst_23 [0] : vector<1x8x128xf32> to vector<8x128xf32>
    %51 = vector.shape_cast %50 : vector<8x128xf32> to vector<1x1x8x128xf32>
    %52 = arith.addf %48, %51 : vector<1x1x8x128xf32>
    %c0_24 = arith.constant 0 : index
    %c0_25 = arith.constant 0 : index
    %c0_26 = arith.constant 0 : index
    %c0_27 = arith.constant 0 : index
    %53 = vector.load %arg6[%c0_24, %c0_25, %c0_26, %c0_27] : memref<1x1x8x128xf32, #tpu.memory_space<vmem>>, vector<1x1x8x128xf32>
    tpu.vector_store %arg6[%c0_24, %c0_25, %c0_26, %c0_27], %52 {strides = array<i32>} : memref<1x1x8x128xf32, #tpu.memory_space<vmem>>, vector<1x1x8x128xf32>,
    %c0_28 = arith.constant 0 : index
    %c0_29 = arith.constant 0 : index
    %c0_30 = arith.constant 0 : index
    %c0_31 = arith.constant 0 : index
    %54 = vector.load %arg7[%c0_28, %c0_29, %c0_30, %c0_31] : memref<1x1x8x128xf32, #tpu.memory_space<vmem>>, vector<1x1x8x128xf32>
    %55 = vector.shape_cast %47 : vector<8x128xf32> to vector<1x8x128xf32>
    %cst_32 = arith.constant dense<0.000000e+00> : vector<8x128xf32>
    %56 = vector.multi_reduction <add>, %55, %cst_32 [0] : vector<1x8x128xf32> to vector<8x128xf32>
    %57 = vector.shape_cast %56 : vector<8x128xf32> to vector<1x1x8x128xf32>
    %58 = arith.addf %54, %57 : vector<1x1x8x128xf32>
    %c0_33 = arith.constant 0 : index
    %c0_34 = arith.constant 0 : index
    %c0_35 = arith.constant 0 : index
    %c0_36 = arith.constant 0 : index
    %59 = vector.load %arg7[%c0_33, %c0_34, %c0_35, %c0_36] : memref<1x1x8x128xf32, #tpu.memory_space<vmem>>, vector<1x1x8x128xf32>
    tpu.vector_store %arg7[%c0_33, %c0_34, %c0_35, %c0_36], %58 {strides = array<i32>} : memref<1x1x8x128xf32, #tpu.memory_space<vmem>>, vector<1x1x8x128xf32>,
    return
  }
  func.func @transform_0(%arg0: i32, %arg1: i32, %arg2: i32) -> (i32, i32, i32, i32) {
    %c1_i32 = arith.constant 1 : i32
    %0 = arith.muli %arg1, %c1_i32 : i32
    %1 = arith.addi %0, %arg2 : i32
    %c0_i32 = arith.constant 0 : i32
    %c0_i32_0 = arith.constant 0 : i32
    %c0_i32_1 = arith.constant 0 : i32
    return %arg0, %c0_i32, %1, %c0_i32_0 : i32, i32, i32, i32
  }
  func.func @transform_1(%arg0: i32, %arg1: i32, %arg2: i32) -> (i32, i32, i32, i32) {
    %c1_i32 = arith.constant 1 : i32
    %0 = arith.muli %arg1, %c1_i32 : i32
    %1 = arith.addi %0, %arg2 : i32
    %c0_i32 = arith.constant 0 : i32
    %c0_i32_0 = arith.constant 0 : i32
    %c0_i32_1 = arith.constant 0 : i32
    return %arg0, %c0_i32, %1, %c0_i32_0 : i32, i32, i32, i32
  }
  func.func @transform_2(%arg0: i32, %arg1: i32, %arg2: i32) -> (i32, i32) {
    %c0_i32 = arith.constant 0 : i32
    %c0_i32_0 = arith.constant 0 : i32
    %c0_i32_1 = arith.constant 0 : i32
    return %c0_i32, %c0_i32_0 : i32, i32
  }
  func.func @transform_3(%arg0: i32, %arg1: i32, %arg2: i32) -> (i32, i32, i32, i32) {
    %c0_i32 = arith.constant 0 : i32
    %c0_i32_0 = arith.constant 0 : i32
    %c0_i32_1 = arith.constant 0 : i32
    return %arg0, %arg1, %c0_i32, %c0_i32_0 : i32, i32, i32, i32
  }
  func.func @transform_4(%arg0: i32, %arg1: i32, %arg2: i32) -> (i32, i32, i32, i32) {
    %c0_i32 = arith.constant 0 : i32
    %c0_i32_0 = arith.constant 0 : i32
    %c0_i32_1 = arith.constant 0 : i32
    return %arg0, %arg1, %c0_i32, %c0_i32_0 : i32, i32, i32, i32
  }
}

</mosaic_0001>

<llo_original>
// kernel: tpu_custom_call.1
$region0: #{tpu_custom_call.1}
  #allocation0 [shape = 'u32[]', space=smem, size = 0x4, offset = 0x4, fixed_abs, tag = 'smem constant byte address 0x4 - core index']
  #allocation1 [shape = 'u32[144,128]{1,0:T(1,128)}', space=vmem, size = 0x12000, scoped, tag = 'internal scratch']
  %s0 = inlined_call_operand.hbm [shape: f32[2,4,8,128], index: 0, kind: input, shape index: {}]
  %s1 = inlined_call_operand.hbm [shape: s32[2,1,8,128], index: 1, kind: input, shape index: {}]
  %s2 = inlined_call_operand.vmem [shape: f32[4,1], index: 2, kind: input, shape index: {}]
  %s3 = inlined_call_operand.hbm [shape: f32[2,1,8,128], index: 3, kind: output, shape index: {0}]
  %s4 = inlined_call_operand.hbm [shape: f32[2,1,8,128], index: 4, kind: output, shape index: {1}]
  %5 = xla_tuple %s3, %s4
  %s6 = sld [smem:[#allocation0]]
  $region65: #{tpu_custom_call.1} parent=0
    _
  %s8 = ssub.s32 1, %s6
  %s9 = scalar_select 0, %s8, %s6
  $region1: #{tpu_custom_call.1} parent=0
    #allocation2 [shape = 'u8[32768]{0}', space=vmem, size = 0x8000, scoped, tag = 'input window, operand 0']
    #allocation3 [shape = 's32[2]{0}', space=sflag, size = 0x8, scoped, tag = 'scoped memory for tpu_custom_call.1']
    #allocation4 [shape = 's32[2]{0}', space=sflag, size = 0x8, scoped, tag = 'scoped memory for tpu_custom_call.1']
    #allocation5 [shape = 'u8[8192]{0}', space=vmem, size = 0x2000, scoped, tag = 'input window, operand 1']
    #allocation6 [shape = 's32[2]{0}', space=sflag, size = 0x8, scoped, tag = 'scoped memory for tpu_custom_call.1']
    #allocation7 [shape = 'u8[8192]{0}', space=vmem, size = 0x2000, scoped, tag = 'output window, operand 0']
    #allocation8 [shape = 'u8[8192]{0}', space=vmem, size = 0x2000, scoped, tag = 'output window, operand 1']
    #allocation9 [shape = 's32[2]{0}', space=sflag, size = 0x8, scoped, tag = 'scoped memory for tpu_custom_call.1']
    %10 = vsyncpa [#allocation3], 0
    %s11 = scalar_lea.sflag [#allocation3], 1
    %12 = vsyncpa %s11, 0
    %13 = vsyncpa [#allocation6], 0
    %s14 = scalar_lea.sflag [#allocation6], 1
    %15 = vsyncpa %s14, 0
    %16 = vsyncpa [#allocation4], 0
    %s17 = scalar_lea.sflag [#allocation4], 1
    %18 = vsyncpa %s17, 0
    %19 = vsyncpa [#allocation9], 0
    %s20 = scalar_lea.sflag [#allocation9], 1
    %21 = vsyncpa %s20, 0
    loop: start=0, step=1, limit=4
    $region2: #{tpu_custom_call.1} parent=1 // loop_pre_header
      _
    $region3: #{tpu_custom_call.1} parent=1 // loop_header
      %s23 = sphi 0, %s27
      %p24 = scmp.ge.s32.totalorder %s23, 4
      %s30 = sphi 0, %s49
      %s31 = sphi 0, %s45
      %s32 = sphi 0, %s41
      %s33 = sphi 0, %s30
      %s34 = sphi 0, %s31
      %s35 = sphi 0, %s32
      %s36 = sphi 0, %s33
      %s37 = sphi 0, %s34
      %s38 = sphi 0, %s35
      %s56 = sphi 0, %s58
      %s59 = sphi 0, %s56
      %s60 = sphi 0, %s59
      %s76 = sphi 0, %s60
      %s86 = sphi 0, %s88
      %s89 = sphi 0, %s86
      %s90 = sphi 0, %s89
      %s106 = sphi 0, %s90
      %s110 = sphi 0, %s110
      %s112 = sphi 0, %s110
      %s113 = sphi 0, %s112
      %s127 = sphi 0, %s113
      %s135 = sphi 0, %s137
      %s138 = sphi 0, %s135
      %s139 = sphi 0, %s138
      %s155 = sphi 0, %s139
      %s163 = sphi 0, %s165
      %s166 = sphi 0, %s163
      %s167 = sphi 0, %s166
      %s183 = sphi 0, %s167
    $region4: #{tpu_custom_call.1} parent=1 // loop_header_branch
      %26 = sbr.rel (%p24) target = $region8
    $region5: #{tpu_custom_call.1} parent=1 // loop_body
      %s28 = ssub.s32 %s23, 1
      %s29 = ssub.s32 %s23, 2
      %s39 = sadd.s32 1, %s32
      %p40 = scmp.ge.s32.totalorder %s39, 1
      %s41 = scalar_select %p40, 0, %s39
      %s42 = sadd.s32 1, %s31
      %s43 = scalar_select %p40, %s42, %s31
      %p44 = scmp.ge.s32.totalorder %s43, 1
      %s45 = scalar_select %p44, 0, %s43
      %s46 = sadd.s32 1, %s30
      %s47 = scalar_select %p44, %s46, %s30
      %p48 = scmp.ge.s32.totalorder %s47, 2
      %s49 = scalar_select %p48, 0, %s47
      %s50 = sadd.s32 %s31, %s32
      %s51 = sadd.s32 %s45, %s41
      %s52 = ssub.s32 %s30, %s49
      %s53 = ssub.s32 %s50, %s51
      %s54 = sor.u32 %s52, %s53
      %p55 = scmp.eq.s32.totalorder %s54, 0
      %s57 = sadd.s32 %s56, 1
      %s58 = scalar_select %p55, %s56, %s57
      %p61 = pneg %p55
      %p62 = scmp.eq.s32.totalorder %s23, 1
      %p63 = por %p61, %p62
      %p64 = scmp.ne.s32.totalorder %s56, %s59
      %p65 = scmp.eq.s32.totalorder %s23, 0
      %p66 = por %p64, %p65
      %p67 = scmp.ne.s32.totalorder %s56, %s59
      %p68 = scmp.eq.s32.totalorder %s28, 1
      %p69 = por %p67, %p68
      %p70 = scmp.ne.s32.totalorder %s59, %s60
      %p71 = scmp.eq.s32.totalorder %s28, 0
      %p72 = por %p70, %p71
      %p73 = scmp.ne.s32.totalorder %s59, %s60
      %p74 = scmp.eq.s32.totalorder %s29, 1
      %p75 = por %p73, %p74
      %p77 = scmp.ne.s32.totalorder %s60, %s76
      %p78 = scmp.eq.s32.totalorder %s29, 0
      %p79 = por %p77, %p78
      %s80 = sadd.s32 %s31, %s32
      %s81 = sadd.s32 %s45, %s41
      %s82 = ssub.s32 %s30, %s49
      %s83 = ssub.s32 %s80, %s81
      %s84 = sor.u32 %s82, %s83
      %p85 = scmp.eq.s32.totalorder %s84, 0
      %s87 = sadd.s32 %s86, 1
      %s88 = scalar_select %p85, %s86, %s87
      %p91 = pneg %p85
      %p92 = scmp.eq.s32.totalorder %s23, 1
      %p93 = por %p91, %p92
      %p94 = scmp.ne.s32.totalorder %s86, %s89
      %p95 = scmp.eq.s32.totalorder %s23, 0
      %p96 = por %p94, %p95
      %p97 = scmp.ne.s32.totalorder %s86, %s89
      %p98 = scmp.eq.s32.totalorder %s28, 1
      %p99 = por %p97, %p98
      %p100 = scmp.ne.s32.totalorder %s89, %s90
      %p101 = scmp.eq.s32.totalorder %s28, 0
      %p102 = por %p100, %p101
      %p103 = scmp.ne.s32.totalorder %s89, %s90
      %p104 = scmp.eq.s32.totalorder %s29, 1
      %p105 = por %p103, %p104
      %p107 = scmp.ne.s32.totalorder %s90, %s106
      %p108 = scmp.eq.s32.totalorder %s29, 0
      %p109 = por %p107, %p108
      %s111 = sadd.s32 %s110, 1
      %p114 = scmp.eq.s32.totalorder %s23, 1
      %p115 = scmp.ne.s32.totalorder %s110, %s112
      %p116 = scmp.eq.s32.totalorder %s23, 0
      %p117 = por %p115, %p116
      %p118 = scmp.ne.s32.totalorder %s110, %s112
      %p119 = scmp.eq.s32.totalorder %s28, 1
      %p120 = por %p118, %p119
      %p121 = scmp.ne.s32.totalorder %s112, %s113
      %p122 = scmp.eq.s32.totalorder %s28, 0
      %p123 = por %p121, %p122
      %p124 = scmp.ne.s32.totalorder %s112, %s113
      %p125 = scmp.eq.s32.totalorder %s29, 1
      %p126 = por %p124, %p125
      %p128 = scmp.ne.s32.totalorder %s113, %s127
      %p129 = scmp.eq.s32.totalorder %s29, 0
      %p130 = por %p128, %p129
      %s131 = ssub.s32 %s30, %s49
      %s132 = ssub.s32 %s31, %s45
      %s133 = sor.u32 %s131, %s132
      %p134 = scmp.eq.s32.totalorder %s133, 0
      %s136 = sadd.s32 %s135, 1
      %s137 = scalar_select %p134, %s135, %s136
      %p140 = pneg %p134
      %p141 = scmp.eq.s32.totalorder %s23, 1
      %p142 = por %p140, %p141
      %p143 = scmp.ne.s32.totalorder %s135, %s138
      %p144 = scmp.eq.s32.totalorder %s23, 0
      %p145 = por %p143, %p144
      %p146 = scmp.ne.s32.totalorder %s135, %s138
      %p147 = scmp.eq.s32.totalorder %s28, 1
      %p148 = por %p146, %p147
      %p149 = scmp.ne.s32.totalorder %s138, %s139
      %p150 = scmp.eq.s32.totalorder %s28, 0
      %p151 = por %p149, %p150
      %p152 = scmp.ne.s32.totalorder %s138, %s139
      %p153 = scmp.eq.s32.totalorder %s29, 1
      %p154 = por %p152, %p153
      %p156 = scmp.ne.s32.totalorder %s139, %s155
      %p157 = scmp.eq.s32.totalorder %s29, 0
      %p158 = por %p156, %p157
      %s159 = ssub.s32 %s30, %s49
      %s160 = ssub.s32 %s31, %s45
      %s161 = sor.u32 %s159, %s160
      %p162 = scmp.eq.s32.totalorder %s161, 0
      %s164 = sadd.s32 %s163, 1
      %s165 = scalar_select %p162, %s163, %s164
      %p168 = pneg %p162
      %p169 = scmp.eq.s32.totalorder %s23, 1
      %p170 = por %p168, %p169
      %p171 = scmp.ne.s32.totalorder %s163, %s166
      %p172 = scmp.eq.s32.totalorder %s23, 0
      %p173 = por %p171, %p172
      %p174 = scmp.ne.s32.totalorder %s163, %s166
      %p175 = scmp.eq.s32.totalorder %s28, 1
      %p176 = por %p174, %p175
      %p177 = scmp.ne.s32.totalorder %s166, %s167
      %p178 = scmp.eq.s32.totalorder %s28, 0
      %p179 = por %p177, %p178
      %p180 = scmp.ne.s32.totalorder %s166, %s167
      %p181 = scmp.eq.s32.totalorder %s29, 1
      %p182 = por %p180, %p181
      %p184 = scmp.ne.s32.totalorder %s167, %s183
      %p185 = scmp.eq.s32.totalorder %s29, 0
      %p186 = por %p184, %p185
      %p187 = scmp.le.s32.totalorder 1, %s23
      %p188 = scmp.lt.s32.totalorder %s23, 3
      %p189 = pnand %p187, %p188
      %p190 = pneg %p189
      // Predicated region
      $region9: #{tpu_custom_call.1} parent=5 // pred_check
        _
      $region10: #{tpu_custom_call.1} parent=5 // pred_check_branch
        %192 = sbr.rel (%p189) target = $region12
      $region11: #{tpu_custom_call.1} parent=5 // pred_region
        %s193 = ssub.s32 %s23, 1
        // Predicated region
        $region13: #{tpu_custom_call.1} parent=11 // pred_check
          %p194 = pneg %p123
        $region14: #{tpu_custom_call.1} parent=11 // pred_check_branch
          %196 = sbr.rel (%p194) target = $region16
        $region15: #{tpu_custom_call.1} parent=11 // pred_region
          _
        $region16: #{tpu_custom_call.1} parent=11 // pred_fallthru
          _
      $region12: #{tpu_custom_call.1} parent=5 // pred_fallthru
        _
      %p197 = scmp.lt.s32.totalorder %s23, 2
      // Predicated region
      $region17: #{tpu_custom_call.1} parent=5 // pred_check
        %p198 = pneg %p197
      $region18: #{tpu_custom_call.1} parent=5 // pred_check_branch
        %200 = sbr.rel (%p198) target = $region20
      $region19: #{tpu_custom_call.1} parent=5 // pred_region
        // Predicated region
        $region21: #{tpu_custom_call.1} parent=19 // pred_check
          %p201 = pneg %p66
        $region22: #{tpu_custom_call.1} parent=19 // pred_check_branch
          %203 = sbr.rel (%p201) target = $region24
        $region23: #{tpu_custom_call.1} parent=19 // pred_region
          %s204 = sand.u32 %s56, 1
          %s205 = scalar_lea.sflag [#allocation3], %s204
          %s206 = sand.u32 %s56, 1
          %s207 = smul.addr %s206, 32
          %s208 = scalar_lea.vmem [#allocation2], %s207
          %s209 = sadd.s32 %s31, %s32
          %s211 = ssub.s32 512, 512
          %212 = vsyncadd %s205, %s211
          %s213 = smul.addr %s30, 4
          %s214 = sadd.s32 %s209, %s213
          %s215 = smul.addr %s214, 128
          %s216 = scalar_lea.hbm %s0, %s215
          %s217 = sshll.u32 %s208, 4
          %s218 = int_to_ptr.vmem [resolvable:$true] %s217
          %223 = dma.hbm_to_vmem [thread:$0]  %s216, 512, %s218, %s205, 128, 128, 8
        $region24: #{tpu_custom_call.1} parent=19 // pred_fallthru
          _
        // Predicated region
        $region25: #{tpu_custom_call.1} parent=19 // pred_check
          %p224 = pneg %p96
        $region26: #{tpu_custom_call.1} parent=19 // pred_check_branch
          %226 = sbr.rel (%p224) target = $region28
        $region27: #{tpu_custom_call.1} parent=19 // pred_region
          %s227 = sand.u32 %s86, 1
          %s228 = scalar_lea.sflag [#allocation6], %s227
          %s229 = sand.u32 %s86, 1
          %s230 = smul.addr %s229, 8
          %s231 = scalar_lea.vmem [#allocation5], %s230
          %s232 = sadd.s32 %s31, %s32
          %s234 = ssub.s32 128, 128
          %235 = vsyncadd %s228, %s234
          %s236 = sadd.s32 %s232, %s30
          %s237 = smul.addr %s236, 128
          %s238 = scalar_lea.hbm %s1, %s237
          %s240 = sshll.u32 %s231, 4
          %s241 = int_to_ptr.vmem [resolvable:$true] %s240
          %243 = dma.hbm_to_vmem [thread:$0]  %s238, 128, %s241, %s228
        $region28: #{tpu_custom_call.1} parent=19 // pred_fallthru
          _
      $region20: #{tpu_custom_call.1} parent=5 // pred_fallthru
        _
      %p244 = scmp.le.s32.totalorder 1, %s23
      %p245 = scmp.lt.s32.totalorder %s23, 3
      %p246 = pnand %p244, %p245
      %p247 = pneg %p246
      // Predicated region
      $region29: #{tpu_custom_call.1} parent=5 // pred_check
        _
      $region30: #{tpu_custom_call.1} parent=5 // pred_check_branch
        %249 = sbr.rel (%p246) target = $region32
      $region31: #{tpu_custom_call.1} parent=5 // pred_region
        %s250 = ssub.s32 %s23, 1
        %s251 = sand.u32 %s59, 1
        %s252 = scalar_lea.sflag [#allocation3], %s251
        %s253 = sand.u32 %s59, 1
        %s254 = smul.addr %s253, 32
        %s255 = scalar_lea.vmem [#allocation2], %s254
        // Predicated region
        $region33: #{tpu_custom_call.1} parent=31 // pred_check
          %p256 = pneg %p72
        $region34: #{tpu_custom_call.1} parent=31 // pred_check_branch
          %258 = sbr.rel (%p256) target = $region36
        $region35: #{tpu_custom_call.1} parent=31 // pred_region
          %259 = dma.done %s252, 512
        $region36: #{tpu_custom_call.1} parent=31 // pred_fallthru
          _
        %s260 = sand.u32 %s89, 1
        %s261 = scalar_lea.sflag [#allocation6], %s260
        %s262 = sand.u32 %s89, 1
        %s263 = smul.addr %s262, 8
        %s264 = scalar_lea.vmem [#allocation5], %s263
        // Predicated region
        $region37: #{tpu_custom_call.1} parent=31 // pred_check
          %p265 = pneg %p102
        $region38: #{tpu_custom_call.1} parent=31 // pred_check_branch
          %267 = sbr.rel (%p265) target = $region40
        $region39: #{tpu_custom_call.1} parent=31 // pred_region
          %268 = dma.done %s261, 128
        $region40: #{tpu_custom_call.1} parent=31 // pred_fallthru
          _
        %s269 = sand.u32 %s59, 1
        %s270 = scalar_lea.sflag [#allocation3], %s269
        %s271 = sand.u32 %s59, 1
        %s272 = smul.addr %s271, 32
        %s273 = scalar_lea.vmem [#allocation2], %s272
        %p274 = pneg %p72
        %p275 = pneg %p69
        %s276 = sand.u32 %s89, 1
        %s277 = scalar_lea.sflag [#allocation6], %s276
        %s278 = sand.u32 %s89, 1
        %s279 = smul.addr %s278, 8
        %s280 = scalar_lea.vmem [#allocation5], %s279
        %p281 = pneg %p102
        %p282 = pneg %p99
        %p283 = pneg %p123
        %p284 = pneg %p120
        %p285 = pneg %p151
        %p286 = pneg %p148
        %s287 = sand.u32 %s138, 1
        %s288 = scalar_lea.sflag [#allocation4], %s287
        %s289 = sand.u32 %s138, 1
        %s290 = smul.addr %s289, 8
        %s291 = scalar_lea.vmem [#allocation7], %s290
        %p292 = pneg %p179
        %p293 = pneg %p176
        %s294 = sand.u32 %s166, 1
        %s295 = scalar_lea.sflag [#allocation9], %s294
        %s296 = sand.u32 %s166, 1
        %s297 = smul.addr %s296, 8
        %s298 = scalar_lea.vmem [#allocation8], %s297
        %s299 = sadd.s32 %s34, %s35
        %s300 = sadd.s32 %s34, %s35
        %p301 = scmp.eq.s32.totalorder %s35, 0
        // Predicated region
        $region41: #{tpu_custom_call.1} parent=31 // pred_check
          %p302 = pneg %p301
        $region42: #{tpu_custom_call.1} parent=31 // pred_check_branch
          %304 = sbr.rel (%p302) target = $region44
        $region43: #{tpu_custom_call.1} parent=31 // pred_region
          %305 = vst [vmem:[%s291] sm:$0xff] 0.0
          %306 = vst [vmem:[%s298] sm:$0xff] 0.0
        $region44: #{tpu_custom_call.1} parent=31 // pred_fallthru
          _
        %v307 = vld [vmem:[%s264] sm:$0xff]
        %vm308 = vcmp.ne.s32.totalorder %v307, 4294967196
        %v309 = vld [vmem:[%s255] sm:$0xff]
        %v310 = vld [vmem:[%s255 + $0x8] sm:$0xff]
        %v311 = vld [vmem:[%s255 + $0x10] sm:$0xff]
        %v312 = vld [vmem:[%s255 + $0x18] sm:$0xff]
        %v313 = vsel %vm308, 1, 0
        %vm314 = vcmp.eq.s32.totalorder %v313, 1
        %v315 = vsel %vm314, %v309, 0.0
        %v316 = vsel %vm314, %v310, 0.0
        %v317 = vsel %vm314, %v311, 0.0
        %v318 = vsel %vm314, %v312, 0.0
        %v319 = vmax.f32 %v315, %v316
        %v320 = vmax.f32 %v317, %v318
        %v321 = vmax.f32 %v319, %v320
        %v322 = vsub.f32 %v315, %v321
        %v323 = vsub.f32 %v316, %v321
        %v324 = vsub.f32 %v317, %v321
        %v325 = vsub.f32 %v318, %v321
        %v326 = vmul.f32 %v322, 1.442695
        %v327 = vpow.pop %v326
        %v328 = vmul.f32 %v323, 1.442695
        %v329 = vpow.pop %v328
        %v330 = vmul.f32 %v324, 1.442695
        %v331 = vpow.pop %v330
        %v332 = vmul.f32 %v325, 1.442695
        %v333 = vpow.pop %v332
        %v334 = vadd.f32 %v327, %v329
        %v335 = vadd.f32 %v334, %v331
        %v336 = vadd.f32 %v335, %v333
        %v337 = vlog2.pop %v336
        %v338 = vmul.f32 %v337, 0.6931472
        %vm339 = vcmp.eq.s32.totalorder %v307, 0
        %vm340 = vcmp.eq.s32.totalorder %v307, 1
        %vm341 = vcmp.eq.s32.totalorder %v307, 2
        %vm342 = vcmp.eq.s32.totalorder %v307, 3
        %v343 = vsel %vm339, %v322, 0.0
        %v344 = vsel %vm340, %v323, 0.0
        %v345 = vsel %vm341, %v324, 0.0
        %v346 = vsel %vm342, %v325, 0.0
        %v347 = vadd.f32 %v343, %v344
        %v348 = vadd.f32 %v347, %v345
        %v349 = vadd.f32 %v348, %v346
        %v350 = vsub.f32 %v349, %v338
        %v351 = vld [vmem:[%s2] sm:$0xf]
        %v354 = vunpack.c.l.s4 1966171168
        %v355 = vunpack.c.0.s8 %v354
        %v356 = vlaneseq
        %v357 = vshrl.u32 %v356, 7
        %v358 = vsub.s32 %v355, %v357
        %v359 = vrot.slane %v351, %v358
        %v360 = vcombine.high %v359, %v359
        %v362 = vunpack.c.l.s4 1966171168
        %v363 = vunpack.c.0.s8 %v362
        %v364 = vlaneseq
        %v365 = vshrl.u32 %v364, 7
        %v366 = vsub.s32 %v363, %v365
        %v367 = vrot.slane %v359, %v366
        %v369 = vunpack.c.l.s4 1966171168
        %v370 = vunpack.c.0.s8 %v369
        %v371 = vlaneseq
        %v372 = vshrl.u32 %v371, 7
        %v373 = vsub.s32 %v370, %v372
        %v374 = vrot.slane %v360, %v373
        %v375 = vcombine.high %v367, %v367
        %v376 = vcombine.high %v374, %v374
        %v377 = vlaneseq
        %v378 = vshrl.u32 %v377, 7
        %v379 = vsub.s32 0, %v378
        %v380 = vrot.slane %v367, %v379
        %v381 = vlaneseq
        %v382 = vshrl.u32 %v381, 7
        %v383 = vsub.s32 0, %v382
        %v384 = vrot.slane %v374, %v383
        %v385 = vlaneseq
        %v386 = vshrl.u32 %v385, 7
        %v387 = vsub.s32 0, %v386
        %v388 = vrot.slane %v375, %v387
        %v389 = vlaneseq
        %v390 = vshrl.u32 %v389, 7
        %v391 = vsub.s32 0, %v390
        %v392 = vrot.slane %v376, %v391
        %393 = vset.pattern.permute.xlu0 0
        %394 = vperm.xlu0 %393, %v380
        %v395 = vpop.permute.xlu0 %394
        %397 = vset.pattern.permute.xlu0 0
        %398 = vperm.xlu0 %397, %v384
        %v399 = vpop.permute.xlu0 %398
        %401 = vset.pattern.permute.xlu0 0
        %402 = vperm.xlu0 %401, %v388
        %v403 = vpop.permute.xlu0 %402
        %405 = vset.pattern.permute.xlu0 0
        %406 = vperm.xlu0 %405, %v392
        %v407 = vpop.permute.xlu0 %406
        %v409 = vsel %vm339, %v395, 0.0
        %v410 = vsel %vm340, %v399, 0.0
        %v411 = vsel %vm341, %v403, 0.0
        %v412 = vsel %vm342, %v407, 0.0
        %v413 = vadd.f32 %v409, %v410
        %v414 = vadd.f32 %v413, %v411
        %v415 = vadd.f32 %v414, %v412
        %v416 = vsub.f32 0.0, %v415
        %v417 = vmul.f32 %v416, %v350
        %v418 = vmul.f32 %v350, 1.442695
        %v419 = vpow.pop %v418
        %v420 = vsub.f32 1.0, %v419
        %v421 = vmul.f32 %v420, %v420
        %v422 = vmul.f32 %v421, %v417
        %v423 = vsel %vm308, %v422, 0.0
        %v424 = vcvt.s32.f32 %v313
        %v425 = vld [vmem:[%s291] sm:$0xff]
        %v426 = vadd.f32 %v423, 0.0
        %v427 = vadd.f32 %v425, %v426
        %428 = vst [vmem:[%s291] sm:$0xff] %v427
        %v429 = vld [vmem:[%s298] sm:$0xff]
        %v430 = vadd.f32 %v424, 0.0
        %v431 = vadd.f32 %v429, %v430
        %432 = vst [vmem:[%s298] sm:$0xff] %v431
        %s433 = sand.u32 %s138, 1
        %s434 = scalar_lea.sflag [#allocation4], %s433
        %s435 = sand.u32 %s138, 1
        %s436 = smul.addr %s435, 8
        %s437 = scalar_lea.vmem [#allocation7], %s436
        %s438 = sand.u32 %s166, 1
        %s439 = scalar_lea.sflag [#allocation9], %s438
        %s440 = sand.u32 %s166, 1
        %s441 = smul.addr %s440, 8
        %s442 = scalar_lea.vmem [#allocation8], %s441
        // Predicated region
        $region45: #{tpu_custom_call.1} parent=31 // pred_check
          %p443 = pneg %p148
        $region46: #{tpu_custom_call.1} parent=31 // pred_check_branch
          %445 = sbr.rel (%p443) target = $region48
        $region47: #{tpu_custom_call.1} parent=31 // pred_region
          %s447 = ssub.s32 128, 128
          %448 = vsyncadd %s434, %s447
          %s449 = sadd.s32 %s34, %s33
          %s450 = smul.addr %s449, 128
          %s451 = scalar_lea.hbm %s3, %s450
          %s453 = sshll.u32 %s437, 4
          %s454 = int_to_ptr.vmem [resolvable:$true] %s453
          %456 = dma.vmem_to_hbm [thread:$0]  %s454, 128, %s451, %s434
        $region48: #{tpu_custom_call.1} parent=31 // pred_fallthru
          _
        // Predicated region
        $region49: #{tpu_custom_call.1} parent=31 // pred_check
          %p457 = pneg %p176
        $region50: #{tpu_custom_call.1} parent=31 // pred_check_branch
          %459 = sbr.rel (%p457) target = $region52
        $region51: #{tpu_custom_call.1} parent=31 // pred_region
          %s461 = ssub.s32 128, 128
          %462 = vsyncadd %s439, %s461
          %s463 = sadd.s32 %s34, %s33
          %s464 = smul.addr %s463, 128
          %s465 = scalar_lea.hbm %s4, %s464
          %s467 = sshll.u32 %s442, 4
          %s468 = int_to_ptr.vmem [resolvable:$true] %s467
          %470 = dma.vmem_to_hbm [thread:$0]  %s468, 128, %s465, %s439
        $region52: #{tpu_custom_call.1} parent=31 // pred_fallthru
          _
      $region32: #{tpu_custom_call.1} parent=5 // pred_fallthru
        _
      %p471 = scmp.le.s32.totalorder 2, %s23
      // Predicated region
      $region53: #{tpu_custom_call.1} parent=5 // pred_check
        %p472 = pneg %p471
      $region54: #{tpu_custom_call.1} parent=5 // pred_check_branch
        %474 = sbr.rel (%p472) target = $region56
      $region55: #{tpu_custom_call.1} parent=5 // pred_region
        %s475 = ssub.s32 %s23, 2
        // Predicated region
        $region57: #{tpu_custom_call.1} parent=55 // pred_check
          %p476 = pneg %p154
        $region58: #{tpu_custom_call.1} parent=55 // pred_check_branch
          %478 = sbr.rel (%p476) target = $region60
        $region59: #{tpu_custom_call.1} parent=55 // pred_region
          %s479 = sand.u32 %s139, 1
          %s480 = scalar_lea.sflag [#allocation4], %s479
          %s481 = sand.u32 %s139, 1
          %s482 = smul.addr %s481, 8
          %s483 = scalar_lea.vmem [#allocation7], %s482
          %484 = dma.done %s480, 128
        $region60: #{tpu_custom_call.1} parent=55 // pred_fallthru
          _
        // Predicated region
        $region61: #{tpu_custom_call.1} parent=55 // pred_check
          %p485 = pneg %p182
        $region62: #{tpu_custom_call.1} parent=55 // pred_check_branch
          %487 = sbr.rel (%p485) target = $region64
        $region63: #{tpu_custom_call.1} parent=55 // pred_region
          %s488 = sand.u32 %s167, 1
          %s489 = scalar_lea.sflag [#allocation9], %s488
          %s490 = sand.u32 %s167, 1
          %s491 = smul.addr %s490, 8
          %s492 = scalar_lea.vmem [#allocation8], %s491
          %493 = dma.done %s489, 128
        $region64: #{tpu_custom_call.1} parent=55 // pred_fallthru
          _
      $region56: #{tpu_custom_call.1} parent=5 // pred_fallthru
        _
    $region6: #{tpu_custom_call.1} parent=1 // loop_footer
      %s27 = sadd.s32 1, %s23
    $region7: #{tpu_custom_call.1} parent=1 // loop_footer_branch
      %22 = sbr.rel target = $region3
    $region8: #{tpu_custom_call.1} parent=1 // loop_exit
      _
    %494 = vsyncpa [#allocation3], 1
    %s495 = scalar_lea.sflag [#allocation3], 1
    %496 = vsyncpa %s495, 1
    %497 = vsyncpa [#allocation6], 1
    %s498 = scalar_lea.sflag [#allocation6], 1
    %499 = vsyncpa %s498, 1
    %500 = vsyncpa [#allocation4], 1
    %s501 = scalar_lea.sflag [#allocation4], 1
    %502 = vsyncpa %s501, 1
    %503 = vsyncpa [#allocation9], 1
    %s504 = scalar_lea.sflag [#allocation9], 1
    %505 = vsyncpa %s504, 1

</llo_original>
